<compile_context>
chip_gen: v7x
topology: tpu7x:2x2x1
jax: 0.10.0
libtpu: 0.0.40
codegen_flags: <defaults>
</compile_context>

<pallas_src>
import functools

import jax
import jax.numpy as jnp
from jax.experimental import pallas as pl
from jax.experimental.pallas import tpu as pltpu


# ---------------------------------------------------------------------------
# Hardware introspection (best effort; conservative defaults if unavailable).
# ---------------------------------------------------------------------------

def _tpu_info():
    try:
        return pltpu.get_tpu_info()
    except Exception:
        return None


def _vmem_capacity_bytes():
    info = _tpu_info()
    if info is not None:
        try:
            cap = int(getattr(info, "vmem_capacity_bytes", 0))
        except Exception:
            cap = 0
        if cap > 0:
            return cap
    return 64 << 20          # conservative: v7x per-TensorCore VMEM


def _num_tensorcores():
    """Per-chip TensorCore count; only trust values of 1 or 2."""
    info = _tpu_info()
    if info is not None:
        for name in ("num_cores_per_chip", "cores_per_chip", "num_tensorcores",
                     "tensorcore_count", "num_cores", "core_count"):
            try:
                v = int(getattr(info, name, 0))
            except Exception:
                v = 0
            if v in (1, 2):
                return v
    return 1                 # v5e/v6e (and unknown chips) -> single TC


# ---------------------------------------------------------------------------
# Tile / VMEM planning.
# ---------------------------------------------------------------------------

_T_TILE_FLOOR = 2048    # keep per-row DMA runs >= 8 KiB (f32) for HBM efficiency
_T_TILE_CAP = 16384
_HEADROOM = 4 << 20     # Mosaic temporaries, output buffers, bookkeeping


def _ceil_div(a, b):
    return -(-a // b)


def _plan(T, streams, requested_t_tile):
    """Pick the time tile and an explicit VMEM limit.

    streams: list of (rows, itemsize) for every input slab.
    Returns (t_tile, vmem_limit_bytes).
    """
    per_lane = 0
    for rows, itemsize in streams:
        rows_padded = _ceil_div(rows, 8) * 8         # sublane padding
        per_lane += 2 * rows_padded * itemsize       # double-buffered inputs
    acc_per_lane = 8 * 4                             # (8, tt) f32 accumulator

    vmem_cap = _vmem_capacity_bytes()
    ceiling = min((vmem_cap * 3) // 4, 96 << 20)     # never claim all of VMEM
    input_budget = (ceiling * 5) // 8

    if requested_t_tile is not None:
        tt = int(requested_t_tile)
        if tt >= T:
            tt = T
        else:
            assert tt % 128 == 0, "t_tile must be a multiple of 128 when < T"
    else:
        tt = (input_budget // per_lane) // 128 * 128
        tt = min(max(tt, _T_TILE_FLOOR), _T_TILE_CAP)
        if T <= tt:
            tt = T

    def need(t):
        return per_lane * t + acc_per_lane * t + _HEADROOM

    if need(tt) > ceiling and requested_t_tile is None and tt > 128:
        # TODO(synk): split the row set over another grid axis instead of
        # shrinking the time tile below the DMA-efficiency floor.
        max_tt = ((ceiling - _HEADROOM) // (per_lane + acc_per_lane)) // 128 * 128
        max_tt = max(128, max_tt)
        tt = T if T <= max_tt else max_tt

    vmem_limit = int(min(max(need(tt), 16 << 20), ceiling))
    return tt, vmem_limit


# ---------------------------------------------------------------------------
# Kernel.
# ---------------------------------------------------------------------------

def _accum_rows(acc_ref, rows, t_tile, load_chunk):
    """acc_ref(8, tt) += stream, folded in sublane-aligned 8-row strips.

    load_chunk(lo, hi) returns the f32 (hi-lo, tt) contribution of rows
    [lo, hi) (already scaled / masked / negated).  Folding strip-by-strip
    bounds the live range to one strip (no full-tile accumulator chains).
    """
    nfull = rows // 8
    for c in range(nfull):
        acc_ref[...] += load_chunk(c * 8, c * 8 + 8)
    rem = rows - nfull * 8
    if rem == 0:
        return
    sub = jax.lax.broadcasted_iota(jnp.int32, (8, 1), 0)
    if rows >= 8:
        # Overlapping 8-row window over the ragged tail; sublanes already folded
        # by the full strips are masked off (pure VPU, no concat copies).
        tail = load_chunk(rows - 8, rows)
        acc_ref[...] += jnp.where(sub >= 8 - rem, tail, 0.0)
    else:
        head = load_chunk(0, rows)
        pad = jnp.zeros((8 - rows, t_tile), jnp.float32)
        acc_ref[...] += jnp.concatenate([head, pad], axis=0)


def _waveglow_kernel(*refs, n_s, scale, n_t, n_tiles, t_tile, t_total,
                     tail_partial, needs_clamp):
    z_ref = refs[0]
    s_refs = refs[1:1 + n_s]
    out_ref = refs[1 + n_s]
    acc_ref = refs[2 + n_s]

    t = pl.program_id(1)

    @pl.when(t == 0)
    def _():
        acc_ref[...] = jnp.zeros_like(acc_ref)

    def fold(lane_mask):
        def z_chunk(lo, hi):
            v = z_ref[lo:hi, :].astype(jnp.float32)
            v = (v * v) * scale                     # z*z / (2 sigma^2)
            if lane_mask is not None:
                v = jnp.where(lane_mask, v, 0.0)
            return v

        _accum_rows(acc_ref, z_ref.shape[0], t_tile, z_chunk)

        for s_ref in s_refs:
            def s_chunk(lo, hi, s_ref=s_ref):
                v = -s_ref[lo:hi, :].astype(jnp.float32)   # -log_s
                if lane_mask is not None:
                    v = jnp.where(lane_mask, v, 0.0)
                return v

            _accum_rows(acc_ref, s_ref.shape[0], t_tile, s_chunk)

    if not (tail_partial or needs_clamp):
        fold(None)                              # unmasked fast path only
    else:
        idx = pl.program_id(0) * n_t + t        # un-clamped global tile index
        first_masked = n_tiles - 1 if tail_partial else n_tiles

        @pl.when(idx < first_masked)
        def _():
            fold(None)                          # interior tiles: no masking

        if tail_partial:
            lane = jax.lax.broadcasted_iota(jnp.int32, (1, t_tile), 1)
            lane_mask = ((n_tiles - 1) * t_tile + lane) < t_total

            @pl.when(idx == n_tiles - 1)
            def _():
                fold(lane_mask)                 # partial last tile: mask OOB
        # idx >= n_tiles: clamped re-read of the last block -> skipped entirely.

    @pl.when(t == pl.num_programs(1) - 1)
    def _():
        # single cross-lane/sublane reduce per parallel slice
        out_ref[...] = jnp.full(out_ref.shape, jnp.sum(acc_ref[...]),
                                out_ref.dtype)


# ---------------------------------------------------------------------------
# Wrapper.
# ---------------------------------------------------------------------------

def _run_partial_sums(z2d, s2d, sigma, requested_t_tile, n_par, core_parallel):
    T = z2d.shape[1]
    streams = [(z2d.shape[0], z2d.dtype.itemsize)] + [
        (s.shape[0], s.dtype.itemsize) for s in s2d]
    tt, vmem_limit = _plan(T, streams, requested_t_tile)

    n_tiles = _ceil_div(T, tt)
    n_par = max(1, min(int(n_par), n_tiles))
    n_t = _ceil_div(n_tiles, n_par)
    needs_clamp = (n_par * n_t != n_tiles)
    tail_partial = (n_tiles * tt != T)
    last_tile = n_tiles - 1
    assert n_tiles * tt < 2 ** 31, "time axis too long for int32 lane offsets"

    def time_block(p, t):
        idx = p * n_t + t
        if needs_clamp:
            idx = jnp.minimum(idx, last_tile)   # keep the DMA in bounds
        return idx

    in_specs = [pl.BlockSpec((z2d.shape[0], tt),
                             lambda p, t: (0, time_block(p, t)))]
    for s in s2d:
        in_specs.append(pl.BlockSpec((s.shape[0], tt),
                                     lambda p, t: (0, time_block(p, t))))

    kernel = functools.partial(
        _waveglow_kernel,
        n_s=len(s2d),
        scale=1.0 / (2.0 * float(sigma) * float(sigma)),
        n_t=n_t, n_tiles=n_tiles, t_tile=tt, t_total=T,
        tail_partial=tail_partial, needs_clamp=needs_clamp)

    # Only CORE_PARALLEL actually shards a grid axis across TensorCores; on
    # single-TC chips the leading axis is size 1 and stays "arbitrary".
    if core_parallel and n_par > 1 and hasattr(pltpu, "CORE_PARALLEL"):
        dims = (pltpu.CORE_PARALLEL, pltpu.ARBITRARY)
    else:
        dims = ("arbitrary", "arbitrary")

    grid_spec = pltpu.PrefetchScalarGridSpec(
        num_scalar_prefetch=0,
        grid=(n_par, n_t),
        in_specs=in_specs,
        out_specs=pl.BlockSpec((1, 8, 128), lambda p, t: (p, 0, 0)),
        scratch_shapes=[pltpu.VMEM((8, tt), jnp.float32)],
    )

    total_in_bytes = sum(r * T * isz for r, isz in streams)
    total_elems = sum(r * T for r, _ in streams)
    cost = pl.CostEstimate(
        flops=int(2 * z2d.size + total_elems),
        transcendentals=0,
        bytes_accessed=int(total_in_bytes + n_par * 8 * 128 * 4))

    # NOTE: if xprof shows DMA gaps at tile boundaries on v7x, bump the input
    # BlockSpecs to pipeline_mode=pl.Buffered(3); left at the default depth.
    return pl.pallas_call(
        kernel,
        out_shape=jax.ShapeDtypeStruct((n_par, 8, 128), jnp.float32),
        grid_spec=grid_spec,
        compiler_params=pltpu.CompilerParams(
            dimension_semantics=dims,
            vmem_limit_bytes=vmem_limit),
        cost_estimate=cost,
    )(z2d, *s2d)


def waveglow_loss(z, log_s1_list, log_s2_list, log_det_W_list, sigma=1.0,
                  t_tile=None, n_par=None):
    B, C, T = z.shape
    n_flows = len(log_s1_list)
    assert n_flows >= 1 and n_flows == len(log_s2_list) == len(log_det_W_list)

    # Free lane-dense 2D views (contiguous reshapes; dtypes left as supplied).
    z2d = z.reshape(B * C, T)
    s2d = []
    for ls in list(log_s1_list) + list(log_s2_list):
        assert ls.shape[0] == B and ls.shape[-1] == T
        s2d.append(ls.reshape(-1, T))

    # PyTorch semantics: log_det_W entries are scalars accumulated with `+=`.
    ldw = []
    for ld in log_det_W_list:
        ld = jnp.asarray(ld, jnp.float32)
        assert ld.size == 1, "log_det_W entries must be scalars"
        ldw.append(ld.reshape(()))
    log_det_total = jnp.sum(jnp.stack(ldw))

    detected_cores = _num_tensorcores()
    auto_par = n_par is None
    if auto_par:
        want_par = detected_cores if detected_cores >= 2 else 1
    else:
        want_par = max(1, int(n_par))
    want_core_parallel = auto_par and want_par > 1

    try:
        partials = _run_partial_sums(z2d, s2d, sigma, t_tile, want_par,
                                     want_core_parallel)
    except Exception:
        if auto_par and want_par > 1:
            # Multi-TensorCore split unavailable; single-core streaming path.
            partials = _run_partial_sums(z2d, s2d, sigma, t_tile, 1, False)
        else:
            raise

    # Tiny scalar epilogue (mirrors the PyTorch loop over log_det_W_list).
    loss = (jnp.sum(partials[:, 0, 0]) - log_det_total) / float(B * C * T)
    return loss


def waveglow_loss_ref(z, log_s1_list, log_s2_list, log_det_W_list, sigma=1.0):
    zf = z.astype(jnp.float32)
    log_s_total = 0.0
    log_det_W_total = 0.0
    for ls1, ls2, ld in zip(log_s1_list, log_s2_list, log_det_W_list):
        log_s_total = (log_s_total + jnp.sum(ls1.astype(jnp.float32))
                       + jnp.sum(ls2.astype(jnp.float32)))
        log_det_W_total = log_det_W_total + jnp.asarray(ld, jnp.float32).reshape(())
    loss = (jnp.sum(zf * zf) / (2 * sigma * sigma)
            - log_s_total - log_det_W_total)
    return loss / (z.shape[0] * z.shape[1] * z.shape[2])


if __name__ == "__main__":
    key = jax.random.PRNGKey(0)

    # Shapes implied by WaveGlow: z is (batch, remaining_channels, time);
    # each flow contributes log_s1/log_s2 of shape (batch, C//2, time) and a
    # scalar log_det_W. T deliberately NOT a multiple of 128.
    B, C, T = 2, 8, 1000
    n_flows = 3
    sigma = 1.0

    kz, k1, k2, kd = jax.random.split(key, 4)
    z = jax.random.normal(kz, (B, C, T), dtype=jnp.float32)
    log_s1_list = [
        0.5 + 0.05 * jax.random.normal(jax.random.fold_in(k1, i),
                                       (B, C // 2, T), dtype=jnp.float32)
        for i in range(n_flows)]
    log_s2_list = [
        0.5 + 0.05 * jax.random.normal(jax.random.fold_in(k2, i),
                                       (B, C // 2, T), dtype=jnp.float32)
        for i in range(n_flows)]
    log_det_W_list = [
        jnp.float32(0.5) + 0.1 * jax.random.normal(jax.random.fold_in(kd, i), (),
                                                   dtype=jnp.float32)
        for i in range(n_flows)]

    ref = waveglow_loss_ref(z, log_s1_list, log_s2_list, log_det_W_list, sigma)

    def check(val, expect, tol=1e-3):
        val = float(jax.block_until_ready(val))
        expect = float(expect)
        assert abs(val - expect) <= tol * max(1.0, abs(expect)), (val, expect)
        return val

    # 1) Auto tile / auto core split: small T collapses to one VMEM-resident tile.
    loss = waveglow_loss(z, log_s1_list, log_s2_list, log_det_W_list, sigma=sigma)
    loss = jax.block_until_ready(loss)
    if not (float(loss) < 0):      # mirror the PyTorch-side sanity print
        print('no')
    check(loss, ref)

    # 2) Forced small tile: tiled path with a masked partial final tile.
    check(waveglow_loss(z, log_s1_list, log_s2_list, log_det_W_list,
                        sigma=sigma, t_tile=256), ref)

    # 3) Locks the clamped re-read behaviour: odd n_tiles with T % t_tile == 0
    #    and a forced 2-way leading split (serial "arbitrary" loop on 1-TC chips).
    T2 = 768
    z_b = z[..., :T2]
    s1_b = [ls[..., :T2] for ls in log_s1_list]
    s2_b = [ls[..., :T2] for ls in log_s2_list]
    ref_b = waveglow_loss_ref(z_b, s1_b, s2_b, log_det_W_list, sigma)
    check(waveglow_loss(z_b, s1_b, s2_b, log_det_W_list, sigma=sigma,
                        t_tile=256, n_par=2), ref_b)

    # 4) bf16 inputs: exercises the dtype-aware tile budget and in-kernel upcast.
    z_h = z.astype(jnp.bfloat16)
    s1_h = [ls.astype(jnp.bfloat16) for ls in log_s1_list]
    s2_h = [ls.astype(jnp.bfloat16) for ls in log_s2_list]
    ref_h = waveglow_loss_ref(z_h, s1_h, s2_h, log_det_W_list, sigma)
    check(waveglow_loss(z_h, s1_h, s2_h, log_det_W_list, sigma=sigma), ref_h,
          tol=5e-3)

    print("KERNEL_OK")
</pallas_src>

<mosaic_0001>
module attributes {stable_mosaic.version = 11 : i64} {
  func.func @_waveglow_kernel(%arg0: i32, %arg1: i32, %arg2: memref<16x1000xf32, #tpu.memory_space<vmem>>, %arg3: memref<8x1000xf32, #tpu.memory_space<vmem>>, %arg4: memref<8x1000xf32, #tpu.memory_space<vmem>>, %arg5: memref<8x1000xf32, #tpu.memory_space<vmem>>, %arg6: memref<8x1000xf32, #tpu.memory_space<vmem>>, %arg7: memref<8x1000xf32, #tpu.memory_space<vmem>>, %arg8: memref<8x1000xf32, #tpu.memory_space<vmem>>, %arg9: memref<1x8x128xf32, #tpu.memory_space<vmem>>, %arg10: memref<8x1000xf32, #tpu.memory_space<vmem>>) attributes {dimension_semantics = [#tpu.dimension_semantics<arbitrary>, #tpu.dimension_semantics<arbitrary>], iteration_bounds = array<i64: 1, 1>, scalar_prefetch = 0 : i64, scratch_operands = 1 : i64, tpu.core_type = #tpu.core_type<tc>, window_params = [{transform_indices = @transform_0, window_bounds = array<i64: 16, 1000>}, {transform_indices = @transform_1, window_bounds = array<i64: 8, 1000>}, {transform_indices = @transform_2, window_bounds = array<i64: 8, 1000>}, {transform_indices = @transform_3, window_bounds = array<i64: 8, 1000>}, {transform_indices = @transform_4, window_bounds = array<i64: 8, 1000>}, {transform_indices = @transform_5, window_bounds = array<i64: 8, 1000>}, {transform_indices = @transform_6, window_bounds = array<i64: 8, 1000>}, {transform_indices = @transform_7, window_bounds = array<i64: 1, 8, 128>}]} {
    %c0_i32 = arith.constant 0 : i32
    %0 = arith.cmpi eq, %arg1, %c0_i32 : i32
    %1 = arith.extui %0 : i1 to i32
    %c0_i32_0 = arith.constant 0 : i32
    %2 = arith.cmpi ne, %1, %c0_i32_0 : i32
    scf.if %2 {
      %cst_56 = arith.constant 0.000000e+00 : f32
      %56 = vector.broadcast %cst_56 : f32 to vector<8x1000xf32>
      %c0_57 = arith.constant 0 : index
      %c0_58 = arith.constant 0 : index
      %57 = vector.load %arg10[%c0_57, %c0_58] : memref<8x1000xf32, #tpu.memory_space<vmem>>, vector<8x1000xf32>
      tpu.vector_store %arg10[%c0_57, %c0_58], %56 {strides = array<i32>} : memref<8x1000xf32, #tpu.memory_space<vmem>>, vector<8x1000xf32>,
    } else {
    }
    %c0 = arith.constant 0 : index
    %c0_1 = arith.constant 0 : index
    %3 = vector.load %arg10[%c0, %c0_1] : memref<8x1000xf32, #tpu.memory_space<vmem>>, vector<8x1000xf32>
    %c0_2 = arith.constant 0 : index
    %c0_3 = arith.constant 0 : index
    %4 = vector.load %arg2[%c0_2, %c0_3] : memref<16x1000xf32, #tpu.memory_space<vmem>>, vector<8x1000xf32>
    %5 = arith.mulf %4, %4 : vector<8x1000xf32>
    %cst = arith.constant 5.000000e-01 : f32
    %6 = vector.broadcast %cst : f32 to vector<8x1000xf32>
    %7 = arith.mulf %5, %6 : vector<8x1000xf32>
    %8 = arith.addf %3, %7 : vector<8x1000xf32>
    %c0_4 = arith.constant 0 : index
    %c0_5 = arith.constant 0 : index
    %9 = vector.load %arg10[%c0_4, %c0_5] : memref<8x1000xf32, #tpu.memory_space<vmem>>, vector<8x1000xf32>
    tpu.vector_store %arg10[%c0_4, %c0_5], %8 {strides = array<i32>} : memref<8x1000xf32, #tpu.memory_space<vmem>>, vector<8x1000xf32>,
    %c0_6 = arith.constant 0 : index
    %c0_7 = arith.constant 0 : index
    %10 = vector.load %arg10[%c0_6, %c0_7] : memref<8x1000xf32, #tpu.memory_space<vmem>>, vector<8x1000xf32>
    %c8 = arith.constant 8 : index
    %c0_8 = arith.constant 0 : index
    %11 = vector.load %arg2[%c8, %c0_8] : memref<16x1000xf32, #tpu.memory_space<vmem>>, vector<8x1000xf32>
    %12 = arith.mulf %11, %11 : vector<8x1000xf32>
    %cst_9 = arith.constant 5.000000e-01 : f32
    %13 = vector.broadcast %cst_9 : f32 to vector<8x1000xf32>
    %14 = arith.mulf %12, %13 : vector<8x1000xf32>
    %15 = arith.addf %10, %14 : vector<8x1000xf32>
    %c0_10 = arith.constant 0 : index
    %c0_11 = arith.constant 0 : index
    %16 = vector.load %arg10[%c0_10, %c0_11] : memref<8x1000xf32, #tpu.memory_space<vmem>>, vector<8x1000xf32>
    tpu.vector_store %arg10[%c0_10, %c0_11], %15 {strides = array<i32>} : memref<8x1000xf32, #tpu.memory_space<vmem>>, vector<8x1000xf32>,
    %c0_12 = arith.constant 0 : index
    %c0_13 = arith.constant 0 : index
    %17 = vector.load %arg10[%c0_12, %c0_13] : memref<8x1000xf32, #tpu.memory_space<vmem>>, vector<8x1000xf32>
    %c0_14 = arith.constant 0 : index
    %c0_15 = arith.constant 0 : index
    %18 = vector.load %arg3[%c0_14, %c0_15] : memref<8x1000xf32, #tpu.memory_space<vmem>>, vector<8x1000xf32>
    %cst_16 = arith.constant 0.000000e+00 : f32
    %19 = vector.broadcast %cst_16 : f32 to vector<8x1000xf32>
    %20 = arith.subf %19, %18 : vector<8x1000xf32>
    %21 = arith.addf %17, %20 : vector<8x1000xf32>
    %c0_17 = arith.constant 0 : index
    %c0_18 = arith.constant 0 : index
    %22 = vector.load %arg10[%c0_17, %c0_18] : memref<8x1000xf32, #tpu.memory_space<vmem>>, vector<8x1000xf32>
    tpu.vector_store %arg10[%c0_17, %c0_18], %21 {strides = array<i32>} : memref<8x1000xf32, #tpu.memory_space<vmem>>, vector<8x1000xf32>,
    %c0_19 = arith.constant 0 : index
    %c0_20 = arith.constant 0 : index
    %23 = vector.load %arg10[%c0_19, %c0_20] : memref<8x1000xf32, #tpu.memory_space<vmem>>, vector<8x1000xf32>
    %c0_21 = arith.constant 0 : index
    %c0_22 = arith.constant 0 : index
    %24 = vector.load %arg4[%c0_21, %c0_22] : memref<8x1000xf32, #tpu.memory_space<vmem>>, vector<8x1000xf32>
    %cst_23 = arith.constant 0.000000e+00 : f32
    %25 = vector.broadcast %cst_23 : f32 to vector<8x1000xf32>
    %26 = arith.subf %25, %24 : vector<8x1000xf32>
    %27 = arith.addf %23, %26 : vector<8x1000xf32>
    %c0_24 = arith.constant 0 : index
    %c0_25 = arith.constant 0 : index
    %28 = vector.load %arg10[%c0_24, %c0_25] : memref<8x1000xf32, #tpu.memory_space<vmem>>, vector<8x1000xf32>
    tpu.vector_store %arg10[%c0_24, %c0_25], %27 {strides = array<i32>} : memref<8x1000xf32, #tpu.memory_space<vmem>>, vector<8x1000xf32>,
    %c0_26 = arith.constant 0 : index
    %c0_27 = arith.constant 0 : index
    %29 = vector.load %arg10[%c0_26, %c0_27] : memref<8x1000xf32, #tpu.memory_space<vmem>>, vector<8x1000xf32>
    %c0_28 = arith.constant 0 : index
    %c0_29 = arith.constant 0 : index
    %30 = vector.load %arg5[%c0_28, %c0_29] : memref<8x1000xf32, #tpu.memory_space<vmem>>, vector<8x1000xf32>
    %cst_30 = arith.constant 0.000000e+00 : f32
    %31 = vector.broadcast %cst_30 : f32 to vector<8x1000xf32>
    %32 = arith.subf %31, %30 : vector<8x1000xf32>
    %33 = arith.addf %29, %32 : vector<8x1000xf32>
    %c0_31 = arith.constant 0 : index
    %c0_32 = arith.constant 0 : index
    %34 = vector.load %arg10[%c0_31, %c0_32] : memref<8x1000xf32, #tpu.memory_space<vmem>>, vector<8x1000xf32>
    tpu.vector_store %arg10[%c0_31, %c0_32], %33 {strides = array<i32>} : memref<8x1000xf32, #tpu.memory_space<vmem>>, vector<8x1000xf32>,
    %c0_33 = arith.constant 0 : index
    %c0_34 = arith.constant 0 : index
    %35 = vector.load %arg10[%c0_33, %c0_34] : memref<8x1000xf32, #tpu.memory_space<vmem>>, vector<8x1000xf32>
    %c0_35 = arith.constant 0 : index
    %c0_36 = arith.constant 0 : index
    %36 = vector.load %arg6[%c0_35, %c0_36] : memref<8x1000xf32, #tpu.memory_space<vmem>>, vector<8x1000xf32>
    %cst_37 = arith.constant 0.000000e+00 : f32
    %37 = vector.broadcast %cst_37 : f32 to vector<8x1000xf32>
    %38 = arith.subf %37, %36 : vector<8x1000xf32>
    %39 = arith.addf %35, %38 : vector<8x1000xf32>
    %c0_38 = arith.constant 0 : index
    %c0_39 = arith.constant 0 : index
    %40 = vector.load %arg10[%c0_38, %c0_39] : memref<8x1000xf32, #tpu.memory_space<vmem>>, vector<8x1000xf32>
    tpu.vector_store %arg10[%c0_38, %c0_39], %39 {strides = array<i32>} : memref<8x1000xf32, #tpu.memory_space<vmem>>, vector<8x1000xf32>,
    %c0_40 = arith.constant 0 : index
    %c0_41 = arith.constant 0 : index
    %41 = vector.load %arg10[%c0_40, %c0_41] : memref<8x1000xf32, #tpu.memory_space<vmem>>, vector<8x1000xf32>
    %c0_42 = arith.constant 0 : index
    %c0_43 = arith.constant 0 : index
    %42 = vector.load %arg7[%c0_42, %c0_43] : memref<8x1000xf32, #tpu.memory_space<vmem>>, vector<8x1000xf32>
    %cst_44 = arith.constant 0.000000e+00 : f32
    %43 = vector.broadcast %cst_44 : f32 to vector<8x1000xf32>
    %44 = arith.subf %43, %42 : vector<8x1000xf32>
    %45 = arith.addf %41, %44 : vector<8x1000xf32>
    %c0_45 = arith.constant 0 : index
    %c0_46 = arith.constant 0 : index
    %46 = vector.load %arg10[%c0_45, %c0_46] : memref<8x1000xf32, #tpu.memory_space<vmem>>, vector<8x1000xf32>
    tpu.vector_store %arg10[%c0_45, %c0_46], %45 {strides = array<i32>} : memref<8x1000xf32, #tpu.memory_space<vmem>>, vector<8x1000xf32>,
    %c0_47 = arith.constant 0 : index
    %c0_48 = arith.constant 0 : index
    %47 = vector.load %arg10[%c0_47, %c0_48] : memref<8x1000xf32, #tpu.memory_space<vmem>>, vector<8x1000xf32>
    %c0_49 = arith.constant 0 : index
    %c0_50 = arith.constant 0 : index
    %48 = vector.load %arg8[%c0_49, %c0_50] : memref<8x1000xf32, #tpu.memory_space<vmem>>, vector<8x1000xf32>
    %cst_51 = arith.constant 0.000000e+00 : f32
    %49 = vector.broadcast %cst_51 : f32 to vector<8x1000xf32>
    %50 = arith.subf %49, %48 : vector<8x1000xf32>
    %51 = arith.addf %47, %50 : vector<8x1000xf32>
    %c0_52 = arith.constant 0 : index
    %c0_53 = arith.constant 0 : index
    %52 = vector.load %arg10[%c0_52, %c0_53] : memref<8x1000xf32, #tpu.memory_space<vmem>>, vector<8x1000xf32>
    tpu.vector_store %arg10[%c0_52, %c0_53], %51 {strides = array<i32>} : memref<8x1000xf32, #tpu.memory_space<vmem>>, vector<8x1000xf32>,
    %c0_i32_54 = arith.constant 0 : i32
    %53 = arith.cmpi eq, %arg1, %c0_i32_54 : i32
    %54 = arith.extui %53 : i1 to i32
    %c0_i32_55 = arith.constant 0 : i32
    %55 = arith.cmpi ne, %54, %c0_i32_55 : i32
    scf.if %55 {
      %c0_56 = arith.constant 0 : index
      %c0_57 = arith.constant 0 : index
      %56 = vector.load %arg10[%c0_56, %c0_57] : memref<8x1000xf32, #tpu.memory_space<vmem>>, vector<8x1000xf32>
      %57 = vector.shape_cast %56 : vector<8x1000xf32> to vector<1x8x1000xf32>
      %cst_58 = arith.constant dense<0.000000e+00> : vector<1xf32>
      %58 = vector.multi_reduction <add>, %57, %cst_58 [1, 2] : vector<1x8x1000xf32> to vector<1xf32>
      %59 = vector.shape_cast %58 : vector<1xf32> to vector<1x1x1xf32>
      %60 = vector.extract %59[0, 0, 0] : f32 from vector<1x1x1xf32>
      %61 = vector.broadcast %60 : f32 to vector<1x8x128xf32>
      %c0_59 = arith.constant 0 : index
      %c0_60 = arith.constant 0 : index
      %c0_61 = arith.constant 0 : index
      %62 = vector.load %arg9[%c0_59, %c0_60, %c0_61] : memref<1x8x128xf32, #tpu.memory_space<vmem>>, vector<1x8x128xf32>
      tpu.vector_store %arg9[%c0_59, %c0_60, %c0_61], %61 {strides = array<i32>} : memref<1x8x128xf32, #tpu.memory_space<vmem>>, vector<1x8x128xf32>,
    } else {
    }
    return
  }
  func.func @transform_0(%arg0: i32, %arg1: i32) -> (i32, i32) {
    %c1_i32 = arith.constant 1 : i32
    %0 = arith.muli %arg0, %c1_i32 : i32
    %1 = arith.addi %0, %arg1 : i32
    %c0_i32 = arith.constant 0 : i32
    %c0_i32_0 = arith.constant 0 : i32
    return %c0_i32, %1 : i32, i32
  }
  func.func @transform_1(%arg0: i32, %arg1: i32) -> (i32, i32) {
    %c1_i32 = arith.constant 1 : i32
    %0 = arith.muli %arg0, %c1_i32 : i32
    %1 = arith.addi %0, %arg1 : i32
    %c0_i32 = arith.constant 0 : i32
    %c0_i32_0 = arith.constant 0 : i32
    return %c0_i32, %1 : i32, i32
  }
  func.func @transform_2(%arg0: i32, %arg1: i32) -> (i32, i32) {
    %c1_i32 = arith.constant 1 : i32
    %0 = arith.muli %arg0, %c1_i32 : i32
    %1 = arith.addi %0, %arg1 : i32
    %c0_i32 = arith.constant 0 : i32
    %c0_i32_0 = arith.constant 0 : i32
    return %c0_i32, %1 : i32, i32
  }
  func.func @transform_3(%arg0: i32, %arg1: i32) -> (i32, i32) {
    %c1_i32 = arith.constant 1 : i32
    %0 = arith.muli %arg0, %c1_i32 : i32
    %1 = arith.addi %0, %arg1 : i32
    %c0_i32 = arith.constant 0 : i32
    %c0_i32_0 = arith.constant 0 : i32
    return %c0_i32, %1 : i32, i32
  }
  func.func @transform_4(%arg0: i32, %arg1: i32) -> (i32, i32) {
    %c1_i32 = arith.constant 1 : i32
    %0 = arith.muli %arg0, %c1_i32 : i32
    %1 = arith.addi %0, %arg1 : i32
    %c0_i32 = arith.constant 0 : i32
    %c0_i32_0 = arith.constant 0 : i32
    return %c0_i32, %1 : i32, i32
  }
  func.func @transform_5(%arg0: i32, %arg1: i32) -> (i32, i32) {
    %c1_i32 = arith.constant 1 : i32
    %0 = arith.muli %arg0, %c1_i32 : i32
    %1 = arith.addi %0, %arg1 : i32
    %c0_i32 = arith.constant 0 : i32
    %c0_i32_0 = arith.constant 0 : i32
    return %c0_i32, %1 : i32, i32
  }
  func.func @transform_6(%arg0: i32, %arg1: i32) -> (i32, i32) {
    %c1_i32 = arith.constant 1 : i32
    %0 = arith.muli %arg0, %c1_i32 : i32
    %1 = arith.addi %0, %arg1 : i32
    %c0_i32 = arith.constant 0 : i32
    %c0_i32_0 = arith.constant 0 : i32
    return %c0_i32, %1 : i32, i32
  }
  func.func @transform_7(%arg0: i32, %arg1: i32) -> (i32, i32, i32) {
    %c0_i32 = arith.constant 0 : i32
    %c0_i32_0 = arith.constant 0 : i32
    %c0_i32_1 = arith.constant 0 : i32
    return %arg0, %c0_i32, %c0_i32_0 : i32, i32, i32
  }
}

</mosaic_0001>

<llo_original>
// kernel: tpu_custom_call.1
$region0: #{tpu_custom_call.1}
  #allocation0 [shape = 'u32[]', space=smem, size = 0x4, offset = 0x4, fixed_abs, tag = 'smem constant byte address 0x4 - core index']
  #allocation1 [shape = 'u32[144,128]{1,0:T(1,128)}', space=vmem, size = 0x12000, scoped, tag = 'internal scratch']
  #allocation2 [shape = 'f32[8,1000]{1,0:T(8,128)}', space=vmem, size = 0x8000, scoped, tag = 'scratch operand']
  %s0 = inlined_call_operand.hbm [shape: f32[16,1000], index: 0, kind: input, shape index: {}]
  %s1 = inlined_call_operand.hbm [shape: f32[8,1000], index: 1, kind: input, shape index: {}]
  %s2 = inlined_call_operand.hbm [shape: f32[8,1000], index: 2, kind: input, shape index: {}]
  %s3 = inlined_call_operand.hbm [shape: f32[8,1000], index: 3, kind: input, shape index: {}]
  %s4 = inlined_call_operand.hbm [shape: f32[8,1000], index: 4, kind: input, shape index: {}]
  %s5 = inlined_call_operand.hbm [shape: f32[8,1000], index: 5, kind: input, shape index: {}]
  %s6 = inlined_call_operand.hbm [shape: f32[8,1000], index: 6, kind: input, shape index: {}]
  %s7 = inlined_call_operand.hbm [shape: f32[1,8,128], index: 7, kind: output, shape index: {}]
  %s8 = sld [smem:[#allocation0]]
  $region74: #{tpu_custom_call.1} parent=0
    _
  %s10 = ssub.s32 1, %s8
  %s11 = scalar_select 0, %s10, %s8
  $region1: #{tpu_custom_call.1} parent=0
    #allocation3 [shape = 'u8[65536]{0}', space=vmem, size = 0x10000, scoped, tag = 'input window, operand 0, single buffered']
    #allocation4 [shape = 's32[1]{0}', space=sflag, size = 0x4, scoped, tag = 'scoped memory for tpu_custom_call.1']
    #allocation5 [shape = 's32[1]{0}', space=sflag, size = 0x4, scoped, tag = 'scoped memory for tpu_custom_call.1']
    #allocation6 [shape = 'u8[32768]{0}', space=vmem, size = 0x8000, scoped, tag = 'input window, operand 1, single buffered']
    #allocation7 [shape = 's32[1]{0}', space=sflag, size = 0x4, scoped, tag = 'scoped memory for tpu_custom_call.1']
    #allocation8 [shape = 'u8[32768]{0}', space=vmem, size = 0x8000, scoped, tag = 'input window, operand 2, single buffered']
    #allocation9 [shape = 'u8[32768]{0}', space=vmem, size = 0x8000, scoped, tag = 'input window, operand 3, single buffered']
    #allocation10 [shape = 's32[1]{0}', space=sflag, size = 0x4, scoped, tag = 'scoped memory for tpu_custom_call.1']
    #allocation11 [shape = 'u8[32768]{0}', space=vmem, size = 0x8000, scoped, tag = 'input window, operand 4, single buffered']
    #allocation12 [shape = 'u8[32768]{0}', space=vmem, size = 0x8000, scoped, tag = 'input window, operand 5, single buffered']
    #allocation13 [shape = 's32[1]{0}', space=sflag, size = 0x4, scoped, tag = 'scoped memory for tpu_custom_call.1']
    #allocation14 [shape = 'u8[32768]{0}', space=vmem, size = 0x8000, scoped, tag = 'input window, operand 6, single buffered']
    #allocation15 [shape = 'u8[4096]{0}', space=vmem, size = 0x1000, scoped, tag = 'output window, operand 0, single buffered']
    %12 = vsyncpa [#allocation4], 0
    %13 = vsyncpa [#allocation7], 0
    %14 = vsyncpa [#allocation10], 0
    %15 = vsyncpa [#allocation13], 0
    %16 = vsyncpa [#allocation5], 0
    // Predicated region
    $region2: #{tpu_custom_call.1} parent=1 // pred_check
      _
    $region3: #{tpu_custom_call.1} parent=1 // pred_check_branch
      %18 = sbr.rel (0) target = $region5
    $region4: #{tpu_custom_call.1} parent=1 // pred_region
      %s19 = sadd.s32 0, 0
      %s20 = smul.u32 8, %s19
      %s22 = ssub.s32 2048, 2048
      %23 = vsyncadd [#allocation4], %s22
      %s24 = smul.addr %s20, 128
      %s25 = scalar_lea.hbm %s0, %s24
      %s26 = sshll.u32 [#allocation3], 4
      %s27 = int_to_ptr.vmem [resolvable:$true] %s26
      %32 = dma.hbm_to_vmem [thread:$0]  %s25, 2048, %s27, [#allocation4], 1024, 1024, 64
    $region5: #{tpu_custom_call.1} parent=1 // pred_fallthru
      _
    // Predicated region
    $region6: #{tpu_custom_call.1} parent=1 // pred_check
      _
    $region7: #{tpu_custom_call.1} parent=1 // pred_check_branch
      %34 = sbr.rel (0) target = $region9
    $region8: #{tpu_custom_call.1} parent=1 // pred_region
      %s35 = sadd.s32 0, 0
      %s36 = smul.u32 8, %s35
      %s38 = ssub.s32 1024, 1024
      %39 = vsyncadd [#allocation7], %s38
      %s40 = smul.addr %s36, 128
      %s41 = scalar_lea.hbm %s1, %s40
      %s43 = sshll.u32 [#allocation6], 4
      %s44 = int_to_ptr.vmem [resolvable:$true] %s43
      %46 = dma.hbm_to_vmem [thread:$0]  %s41, 1024, %s44, [#allocation7]
    $region9: #{tpu_custom_call.1} parent=1 // pred_fallthru
      _
    // Predicated region
    $region10: #{tpu_custom_call.1} parent=1 // pred_check
      _
    $region11: #{tpu_custom_call.1} parent=1 // pred_check_branch
      %48 = sbr.rel (0) target = $region13
    $region12: #{tpu_custom_call.1} parent=1 // pred_region
      %s49 = sadd.s32 0, 0
      %s50 = smul.u32 8, %s49
      %s52 = ssub.s32 1024, 1024
      %53 = vsyncadd [#allocation7], %s52
      %s54 = smul.addr %s50, 128
      %s55 = scalar_lea.hbm %s2, %s54
      %s57 = sshll.u32 [#allocation8], 4
      %s58 = int_to_ptr.vmem [resolvable:$true] %s57
      %60 = dma.hbm_to_vmem [thread:$0]  %s55, 1024, %s58, [#allocation7]
    $region13: #{tpu_custom_call.1} parent=1 // pred_fallthru
      _
    // Predicated region
    $region14: #{tpu_custom_call.1} parent=1 // pred_check
      _
    $region15: #{tpu_custom_call.1} parent=1 // pred_check_branch
      %62 = sbr.rel (0) target = $region17
    $region16: #{tpu_custom_call.1} parent=1 // pred_region
      %s63 = sadd.s32 0, 0
      %s64 = smul.u32 8, %s63
      %s66 = ssub.s32 1024, 1024
      %67 = vsyncadd [#allocation10], %s66
      %s68 = smul.addr %s64, 128
      %s69 = scalar_lea.hbm %s3, %s68
      %s71 = sshll.u32 [#allocation9], 4
      %s72 = int_to_ptr.vmem [resolvable:$true] %s71
      %74 = dma.hbm_to_vmem [thread:$0]  %s69, 1024, %s72, [#allocation10]
    $region17: #{tpu_custom_call.1} parent=1 // pred_fallthru
      _
    // Predicated region
    $region18: #{tpu_custom_call.1} parent=1 // pred_check
      _
    $region19: #{tpu_custom_call.1} parent=1 // pred_check_branch
      %76 = sbr.rel (0) target = $region21
    $region20: #{tpu_custom_call.1} parent=1 // pred_region
      %s77 = sadd.s32 0, 0
      %s78 = smul.u32 8, %s77
      %s80 = ssub.s32 1024, 1024
      %81 = vsyncadd [#allocation10], %s80
      %s82 = smul.addr %s78, 128
      %s83 = scalar_lea.hbm %s4, %s82
      %s85 = sshll.u32 [#allocation11], 4
      %s86 = int_to_ptr.vmem [resolvable:$true] %s85
      %88 = dma.hbm_to_vmem [thread:$0]  %s83, 1024, %s86, [#allocation10]
    $region21: #{tpu_custom_call.1} parent=1 // pred_fallthru
      _
    // Predicated region
    $region22: #{tpu_custom_call.1} parent=1 // pred_check
      _
    $region23: #{tpu_custom_call.1} parent=1 // pred_check_branch
      %90 = sbr.rel (0) target = $region25
    $region24: #{tpu_custom_call.1} parent=1 // pred_region
      %s91 = sadd.s32 0, 0
      %s92 = smul.u32 8, %s91
      %s94 = ssub.s32 1024, 1024
      %95 = vsyncadd [#allocation13], %s94
      %s96 = smul.addr %s92, 128
      %s97 = scalar_lea.hbm %s5, %s96
      %s99 = sshll.u32 [#allocation12], 4
      %s100 = int_to_ptr.vmem [resolvable:$true] %s99
      %102 = dma.hbm_to_vmem [thread:$0]  %s97, 1024, %s100, [#allocation13]
    $region25: #{tpu_custom_call.1} parent=1 // pred_fallthru
      _
    // Predicated region
    $region26: #{tpu_custom_call.1} parent=1 // pred_check
      _
    $region27: #{tpu_custom_call.1} parent=1 // pred_check_branch
      %104 = sbr.rel (0) target = $region29
    $region28: #{tpu_custom_call.1} parent=1 // pred_region
      %s105 = sadd.s32 0, 0
      %s106 = smul.u32 8, %s105
      %s108 = ssub.s32 1024, 1024
      %109 = vsyncadd [#allocation13], %s108
      %s110 = smul.addr %s106, 128
      %s111 = scalar_lea.hbm %s6, %s110
      %s113 = sshll.u32 [#allocation14], 4
      %s114 = int_to_ptr.vmem [resolvable:$true] %s113
      %116 = dma.hbm_to_vmem [thread:$0]  %s111, 1024, %s114, [#allocation13]
    $region29: #{tpu_custom_call.1} parent=1 // pred_fallthru
      _
    // Predicated region
    $region30: #{tpu_custom_call.1} parent=1 // pred_check
      _
    $region31: #{tpu_custom_call.1} parent=1 // pred_check_branch
      %118 = sbr.rel (0) target = $region33
    $region32: #{tpu_custom_call.1} parent=1 // pred_region
      %119 = dma.done [#allocation4], 2048
    $region33: #{tpu_custom_call.1} parent=1 // pred_fallthru
      _
    // Predicated region
    $region34: #{tpu_custom_call.1} parent=1 // pred_check
      _
    $region35: #{tpu_custom_call.1} parent=1 // pred_check_branch
      %121 = sbr.rel (0) target = $region37
    $region36: #{tpu_custom_call.1} parent=1 // pred_region
      %122 = dma.done [#allocation7], 1024
    $region37: #{tpu_custom_call.1} parent=1 // pred_fallthru
      _
    // Predicated region
    $region38: #{tpu_custom_call.1} parent=1 // pred_check
      _
    $region39: #{tpu_custom_call.1} parent=1 // pred_check_branch
      %124 = sbr.rel (0) target = $region41
    $region40: #{tpu_custom_call.1} parent=1 // pred_region
      %125 = dma.done [#allocation7], 1024
    $region41: #{tpu_custom_call.1} parent=1 // pred_fallthru
      _
    // Predicated region
    $region42: #{tpu_custom_call.1} parent=1 // pred_check
      _
    $region43: #{tpu_custom_call.1} parent=1 // pred_check_branch
      %127 = sbr.rel (0) target = $region45
    $region44: #{tpu_custom_call.1} parent=1 // pred_region
      %128 = dma.done [#allocation10], 1024
    $region45: #{tpu_custom_call.1} parent=1 // pred_fallthru
      _
    // Predicated region
    $region46: #{tpu_custom_call.1} parent=1 // pred_check
      _
    $region47: #{tpu_custom_call.1} parent=1 // pred_check_branch
      %130 = sbr.rel (0) target = $region49
    $region48: #{tpu_custom_call.1} parent=1 // pred_region
      %131 = dma.done [#allocation10], 1024
    $region49: #{tpu_custom_call.1} parent=1 // pred_fallthru
      _
    // Predicated region
    $region50: #{tpu_custom_call.1} parent=1 // pred_check
      _
    $region51: #{tpu_custom_call.1} parent=1 // pred_check_branch
      %133 = sbr.rel (0) target = $region53
    $region52: #{tpu_custom_call.1} parent=1 // pred_region
      %134 = dma.done [#allocation13], 1024
    $region53: #{tpu_custom_call.1} parent=1 // pred_fallthru
      _
    // Predicated region
    $region54: #{tpu_custom_call.1} parent=1 // pred_check
      _
    $region55: #{tpu_custom_call.1} parent=1 // pred_check_branch
      %136 = sbr.rel (0) target = $region57
    $region56: #{tpu_custom_call.1} parent=1 // pred_region
      %137 = dma.done [#allocation13], 1024
    $region57: #{tpu_custom_call.1} parent=1 // pred_fallthru
      _
    %s138 = sadd.s32 0, 0
    %s139 = smul.u32 8, %s138
    %s140 = sadd.s32 0, 0
    %s141 = smul.u32 8, %s140
    %s142 = sadd.s32 0, 0
    %s143 = smul.u32 8, %s142
    %s144 = sadd.s32 0, 0
    %s145 = smul.u32 8, %s144
    %s146 = sadd.s32 0, 0
    %s147 = smul.u32 8, %s146
    %s148 = sadd.s32 0, 0
    %s149 = smul.u32 8, %s148
    %s150 = sadd.s32 0, 0
    %s151 = smul.u32 8, %s150
    %p152 = scmp.eq.s32.totalorder 0, 0
    // Predicated region
    $region58: #{tpu_custom_call.1} parent=1 // pred_check
      %p153 = pneg %p152
    $region59: #{tpu_custom_call.1} parent=1 // pred_check_branch
      %155 = sbr.rel (%p153) target = $region61
    $region60: #{tpu_custom_call.1} parent=1 // pred_region
      %156 = vst [vmem:[#allocation2] sm:$0xff] 0.0
      %157 = vst [vmem:[#allocation2 + $0x8] sm:$0xff] 0.0
      %158 = vst [vmem:[#allocation2 + $0x10] sm:$0xff] 0.0
      %159 = vst [vmem:[#allocation2 + $0x18] sm:$0xff] 0.0
      %160 = vst [vmem:[#allocation2 + $0x20] sm:$0xff] 0.0
      %161 = vst [vmem:[#allocation2 + $0x28] sm:$0xff] 0.0
      %162 = vst [vmem:[#allocation2 + $0x30] sm:$0xff] 0.0
      %vm163 = vcmask 850944
      %164 = vst.msk [vmem:[#allocation2 + $0x38] sm:$0xff] %vm163, 0.0
    $region61: #{tpu_custom_call.1} parent=1 // pred_fallthru
      _
    %v165 = vld [vmem:[#allocation2] sm:$0xff]
    %v166 = vld [vmem:[#allocation2 + $0x8] sm:$0xff]
    %v167 = vld [vmem:[#allocation2 + $0x10] sm:$0xff]
    %v168 = vld [vmem:[#allocation2 + $0x18] sm:$0xff]
    %v169 = vld [vmem:[#allocation2 + $0x20] sm:$0xff]
    %v170 = vld [vmem:[#allocation2 + $0x28] sm:$0xff]
    %v171 = vld [vmem:[#allocation2 + $0x30] sm:$0xff]
    %v172 = vld [vmem:[#allocation2 + $0x38] sm:$0xff]
    %v173 = vld [vmem:[#allocation3] sm:$0xff]
    %v174 = vld [vmem:[#allocation3 + $0x8] sm:$0xff]
    %v175 = vld [vmem:[#allocation3 + $0x10] sm:$0xff]
    %v176 = vld [vmem:[#allocation3 + $0x18] sm:$0xff]
    %v177 = vld [vmem:[#allocation3 + $0x20] sm:$0xff]
    %v178 = vld [vmem:[#allocation3 + $0x28] sm:$0xff]
    %v179 = vld [vmem:[#allocation3 + $0x30] sm:$0xff]
    %v180 = vld [vmem:[#allocation3 + $0x38] sm:$0xff]
    %v181 = vmul.f32 %v173, %v173
    %v182 = vmul.f32 %v174, %v174
    %v183 = vmul.f32 %v175, %v175
    %v184 = vmul.f32 %v176, %v176
    %v185 = vmul.f32 %v177, %v177
    %v186 = vmul.f32 %v178, %v178
    %v187 = vmul.f32 %v179, %v179
    %v188 = vmul.f32 %v180, %v180
    %v189 = vmul.f32 %v181, 0.5
    %v190 = vmul.f32 %v182, 0.5
    %v191 = vmul.f32 %v183, 0.5
    %v192 = vmul.f32 %v184, 0.5
    %v193 = vmul.f32 %v185, 0.5
    %v194 = vmul.f32 %v186, 0.5
    %v195 = vmul.f32 %v187, 0.5
    %v196 = vmul.f32 %v188, 0.5
    %v197 = vadd.f32 %v165, %v189
    %v198 = vadd.f32 %v166, %v190
    %v199 = vadd.f32 %v167, %v191
    %v200 = vadd.f32 %v168, %v192
    %v201 = vadd.f32 %v169, %v193
    %v202 = vadd.f32 %v170, %v194
    %v203 = vadd.f32 %v171, %v195
    %v204 = vadd.f32 %v172, %v196
    %205 = vst [vmem:[#allocation2] sm:$0xff] %v197
    %206 = vst [vmem:[#allocation2 + $0x8] sm:$0xff] %v198
    %207 = vst [vmem:[#allocation2 + $0x10] sm:$0xff] %v199
    %208 = vst [vmem:[#allocation2 + $0x18] sm:$0xff] %v200
    %209 = vst [vmem:[#allocation2 + $0x20] sm:$0xff] %v201
    %210 = vst [vmem:[#allocation2 + $0x28] sm:$0xff] %v202
    %211 = vst [vmem:[#allocation2 + $0x30] sm:$0xff] %v203
    %vm212 = vcmask 850944
    %213 = vst.msk [vmem:[#allocation2 + $0x38] sm:$0xff] %vm212, %v204
    %v214 = vld [vmem:[#allocation2] sm:$0xff]
    %v215 = vld [vmem:[#allocation2 + $0x8] sm:$0xff]
    %v216 = vld [vmem:[#allocation2 + $0x10] sm:$0xff]
    %v217 = vld [vmem:[#allocation2 + $0x18] sm:$0xff]
    %v218 = vld [vmem:[#allocation2 + $0x20] sm:$0xff]
    %v219 = vld [vmem:[#allocation2 + $0x28] sm:$0xff]
    %v220 = vld [vmem:[#allocation2 + $0x30] sm:$0xff]
    %v221 = vld [vmem:[#allocation2 + $0x38] sm:$0xff]
    %v222 = vld [vmem:[#allocation3 + $0x40] sm:$0xff]
    %v223 = vld [vmem:[#allocation3 + $0x48] sm:$0xff]
    %v224 = vld [vmem:[#allocation3 + $0x50] sm:$0xff]
    %v225 = vld [vmem:[#allocation3 + $0x58] sm:$0xff]
    %v226 = vld [vmem:[#allocation3 + $0x60] sm:$0xff]
    %v227 = vld [vmem:[#allocation3 + $0x68] sm:$0xff]
    %v228 = vld [vmem:[#allocation3 + $0x70] sm:$0xff]
    %v229 = vld [vmem:[#allocation3 + $0x78] sm:$0xff]
    %v230 = vmul.f32 %v222, %v222
    %v231 = vmul.f32 %v223, %v223
    %v232 = vmul.f32 %v224, %v224
    %v233 = vmul.f32 %v225, %v225
    %v234 = vmul.f32 %v226, %v226
    %v235 = vmul.f32 %v227, %v227
    %v236 = vmul.f32 %v228, %v228
    %v237 = vmul.f32 %v229, %v229
    %v238 = vmul.f32 %v230, 0.5
    %v239 = vmul.f32 %v231, 0.5
    %v240 = vmul.f32 %v232, 0.5
    %v241 = vmul.f32 %v233, 0.5
    %v242 = vmul.f32 %v234, 0.5
    %v243 = vmul.f32 %v235, 0.5
    %v244 = vmul.f32 %v236, 0.5
    %v245 = vmul.f32 %v237, 0.5
    %v246 = vadd.f32 %v214, %v238
    %v247 = vadd.f32 %v215, %v239
    %v248 = vadd.f32 %v216, %v240
    %v249 = vadd.f32 %v217, %v241
    %v250 = vadd.f32 %v218, %v242
    %v251 = vadd.f32 %v219, %v243
    %v252 = vadd.f32 %v220, %v244
    %v253 = vadd.f32 %v221, %v245
    %254 = vst [vmem:[#allocation2] sm:$0xff] %v246
    %255 = vst [vmem:[#allocation2 + $0x8] sm:$0xff] %v247
    %256 = vst [vmem:[#allocation2 + $0x10] sm:$0xff] %v248
    %257 = vst [vmem:[#allocation2 + $0x18] sm:$0xff] %v249
    %258 = vst [vmem:[#allocation2 + $0x20] sm:$0xff] %v250
    %259 = vst [vmem:[#allocation2 + $0x28] sm:$0xff] %v251
    %260 = vst [vmem:[#allocation2 + $0x30] sm:$0xff] %v252
    %261 = vst.msk [vmem:[#allocation2 + $0x38] sm:$0xff] %vm212, %v253
    %v262 = vld [vmem:[#allocation2] sm:$0xff]
    %v263 = vld [vmem:[#allocation2 + $0x8] sm:$0xff]
    %v264 = vld [vmem:[#allocation2 + $0x10] sm:$0xff]
    %v265 = vld [vmem:[#allocation2 + $0x18] sm:$0xff]
    %v266 = vld [vmem:[#allocation2 + $0x20] sm:$0xff]
    %v267 = vld [vmem:[#allocation2 + $0x28] sm:$0xff]
    %v268 = vld [vmem:[#allocation2 + $0x30] sm:$0xff]
    %v269 = vld [vmem:[#allocation2 + $0x38] sm:$0xff]
    %v270 = vld [vmem:[#allocation6] sm:$0xff]
    %v271 = vld [vmem:[#allocation6 + $0x8] sm:$0xff]
    %v272 = vld [vmem:[#allocation6 + $0x10] sm:$0xff]
    %v273 = vld [vmem:[#allocation6 + $0x18] sm:$0xff]
    %v274 = vld [vmem:[#allocation6 + $0x20] sm:$0xff]
    %v275 = vld [vmem:[#allocation6 + $0x28] sm:$0xff]
    %v276 = vld [vmem:[#allocation6 + $0x30] sm:$0xff]
    %v277 = vld [vmem:[#allocation6 + $0x38] sm:$0xff]
    %v278 = vsub.f32 0.0, %v270
    %v279 = vsub.f32 0.0, %v271
    %v280 = vsub.f32 0.0, %v272
    %v281 = vsub.f32 0.0, %v273
    %v282 = vsub.f32 0.0, %v274
    %v283 = vsub.f32 0.0, %v275
    %v284 = vsub.f32 0.0, %v276
    %v285 = vsub.f32 0.0, %v277
    %v286 = vadd.f32 %v262, %v278
    %v287 = vadd.f32 %v263, %v279
    %v288 = vadd.f32 %v264, %v280
    %v289 = vadd.f32 %v265, %v281
    %v290 = vadd.f32 %v266, %v282
    %v291 = vadd.f32 %v267, %v283
    %v292 = vadd.f32 %v268, %v284
    %v293 = vadd.f32 %v269, %v285
    %294 = vst [vmem:[#allocation2] sm:$0xff] %v286
    %295 = vst [vmem:[#allocation2 + $0x8] sm:$0xff] %v287
    %296 = vst [vmem:[#allocation2 + $0x10] sm:$0xff] %v288
    %297 = vst [vmem:[#allocation2 + $0x18] sm:$0xff] %v289
    %298 = vst [vmem:[#allocation2 + $0x20] sm:$0xff] %v290
    %299 = vst [vmem:[#allocation2 + $0x28] sm:$0xff] %v291
    %300 = vst [vmem:[#allocation2 + $0x30] sm:$0xff] %v292
    %301 = vst.msk [vmem:[#allocation2 + $0x38] sm:$0xff] %vm212, %v293
    %v302 = vld [vmem:[#allocation2] sm:$0xff]
    %v303 = vld [vmem:[#allocation2 + $0x8] sm:$0xff]
    %v304 = vld [vmem:[#allocation2 + $0x10] sm:$0xff]
    %v305 = vld [vmem:[#allocation2 + $0x18] sm:$0xff]
    %v306 = vld [vmem:[#allocation2 + $0x20] sm:$0xff]
    %v307 = vld [vmem:[#allocation2 + $0x28] sm:$0xff]
    %v308 = vld [vmem:[#allocation2 + $0x30] sm:$0xff]
    %v309 = vld [vmem:[#allocation2 + $0x38] sm:$0xff]
    %v310 = vld [vmem:[#allocation8] sm:$0xff]
    %v311 = vld [vmem:[#allocation8 + $0x8] sm:$0xff]
    %v312 = vld [vmem:[#allocation8 + $0x10] sm:$0xff]
    %v313 = vld [vmem:[#allocation8 + $0x18] sm:$0xff]
    %v314 = vld [vmem:[#allocation8 + $0x20] sm:$0xff]
    %v315 = vld [vmem:[#allocation8 + $0x28] sm:$0xff]
    %v316 = vld [vmem:[#allocation8 + $0x30] sm:$0xff]
    %v317 = vld [vmem:[#allocation8 + $0x38] sm:$0xff]
    %v318 = vsub.f32 0.0, %v310
    %v319 = vsub.f32 0.0, %v311
    %v320 = vsub.f32 0.0, %v312
    %v321 = vsub.f32 0.0, %v313
    %v322 = vsub.f32 0.0, %v314
    %v323 = vsub.f32 0.0, %v315
    %v324 = vsub.f32 0.0, %v316
    %v325 = vsub.f32 0.0, %v317
    %v326 = vadd.f32 %v302, %v318
    %v327 = vadd.f32 %v303, %v319
    %v328 = vadd.f32 %v304, %v320
    %v329 = vadd.f32 %v305, %v321
    %v330 = vadd.f32 %v306, %v322
    %v331 = vadd.f32 %v307, %v323
    %v332 = vadd.f32 %v308, %v324
    %v333 = vadd.f32 %v309, %v325
    %334 = vst [vmem:[#allocation2] sm:$0xff] %v326
    %335 = vst [vmem:[#allocation2 + $0x8] sm:$0xff] %v327
    %336 = vst [vmem:[#allocation2 + $0x10] sm:$0xff] %v328
    %337 = vst [vmem:[#allocation2 + $0x18] sm:$0xff] %v329
    %338 = vst [vmem:[#allocation2 + $0x20] sm:$0xff] %v330
    %339 = vst [vmem:[#allocation2 + $0x28] sm:$0xff] %v331
    %340 = vst [vmem:[#allocation2 + $0x30] sm:$0xff] %v332
    %341 = vst.msk [vmem:[#allocation2 + $0x38] sm:$0xff] %vm212, %v333
    %v342 = vld [vmem:[#allocation2] sm:$0xff]
    %v343 = vld [vmem:[#allocation2 + $0x8] sm:$0xff]
    %v344 = vld [vmem:[#allocation2 + $0x10] sm:$0xff]
    %v345 = vld [vmem:[#allocation2 + $0x18] sm:$0xff]
    %v346 = vld [vmem:[#allocation2 + $0x20] sm:$0xff]
    %v347 = vld [vmem:[#allocation2 + $0x28] sm:$0xff]
    %v348 = vld [vmem:[#allocation2 + $0x30] sm:$0xff]
    %v349 = vld [vmem:[#allocation2 + $0x38] sm:$0xff]
    %v350 = vld [vmem:[#allocation9] sm:$0xff]
    %v351 = vld [vmem:[#allocation9 + $0x8] sm:$0xff]
    %v352 = vld [vmem:[#allocation9 + $0x10] sm:$0xff]
    %v353 = vld [vmem:[#allocation9 + $0x18] sm:$0xff]
    %v354 = vld [vmem:[#allocation9 + $0x20] sm:$0xff]
    %v355 = vld [vmem:[#allocation9 + $0x28] sm:$0xff]
    %v356 = vld [vmem:[#allocation9 + $0x30] sm:$0xff]
    %v357 = vld [vmem:[#allocation9 + $0x38] sm:$0xff]
    %v358 = vsub.f32 0.0, %v350
    %v359 = vsub.f32 0.0, %v351
    %v360 = vsub.f32 0.0, %v352
    %v361 = vsub.f32 0.0, %v353
    %v362 = vsub.f32 0.0, %v354
    %v363 = vsub.f32 0.0, %v355
    %v364 = vsub.f32 0.0, %v356
    %v365 = vsub.f32 0.0, %v357
    %v366 = vadd.f32 %v342, %v358
    %v367 = vadd.f32 %v343, %v359
    %v368 = vadd.f32 %v344, %v360
    %v369 = vadd.f32 %v345, %v361
    %v370 = vadd.f32 %v346, %v362
    %v371 = vadd.f32 %v347, %v363
    %v372 = vadd.f32 %v348, %v364
    %v373 = vadd.f32 %v349, %v365
    %374 = vst [vmem:[#allocation2] sm:$0xff] %v366
    %375 = vst [vmem:[#allocation2 + $0x8] sm:$0xff] %v367
    %376 = vst [vmem:[#allocation2 + $0x10] sm:$0xff] %v368
    %377 = vst [vmem:[#allocation2 + $0x18] sm:$0xff] %v369
    %378 = vst [vmem:[#allocation2 + $0x20] sm:$0xff] %v370
    %379 = vst [vmem:[#allocation2 + $0x28] sm:$0xff] %v371
    %380 = vst [vmem:[#allocation2 + $0x30] sm:$0xff] %v372
    %381 = vst.msk [vmem:[#allocation2 + $0x38] sm:$0xff] %vm212, %v373
    %v382 = vld [vmem:[#allocation2] sm:$0xff]
    %v383 = vld [vmem:[#allocation2 + $0x8] sm:$0xff]
    %v384 = vld [vmem:[#allocation2 + $0x10] sm:$0xff]
    %v385 = vld [vmem:[#allocation2 + $0x18] sm:$0xff]
    %v386 = vld [vmem:[#allocation2 + $0x20] sm:$0xff]
    %v387 = vld [vmem:[#allocation2 + $0x28] sm:$0xff]
    %v388 = vld [vmem:[#allocation2 + $0x30] sm:$0xff]
    %v389 = vld [vmem:[#allocation2 + $0x38] sm:$0xff]
    %v390 = vld [vmem:[#allocation11] sm:$0xff]
    %v391 = vld [vmem:[#allocation11 + $0x8] sm:$0xff]
    %v392 = vld [vmem:[#allocation11 + $0x10] sm:$0xff]
    %v393 = vld [vmem:[#allocation11 + $0x18] sm:$0xff]
    %v394 = vld [vmem:[#allocation11 + $0x20] sm:$0xff]
    %v395 = vld [vmem:[#allocation11 + $0x28] sm:$0xff]
    %v396 = vld [vmem:[#allocation11 + $0x30] sm:$0xff]
    %v397 = vld [vmem:[#allocation11 + $0x38] sm:$0xff]
    %v398 = vsub.f32 0.0, %v390
    %v399 = vsub.f32 0.0, %v391
    %v400 = vsub.f32 0.0, %v392
    %v401 = vsub.f32 0.0, %v393
    %v402 = vsub.f32 0.0, %v394
    %v403 = vsub.f32 0.0, %v395
    %v404 = vsub.f32 0.0, %v396
    %v405 = vsub.f32 0.0, %v397
    %v406 = vadd.f32 %v382, %v398
    %v407 = vadd.f32 %v383, %v399
    %v408 = vadd.f32 %v384, %v400
    %v409 = vadd.f32 %v385, %v401
    %v410 = vadd.f32 %v386, %v402
    %v411 = vadd.f32 %v387, %v403
    %v412 = vadd.f32 %v388, %v404
    %v413 = vadd.f32 %v389, %v405
    %414 = vst [vmem:[#allocation2] sm:$0xff] %v406
    %415 = vst [vmem:[#allocation2 + $0x8] sm:$0xff] %v407
    %416 = vst [vmem:[#allocation2 + $0x10] sm:$0xff] %v408
    %417 = vst [vmem:[#allocation2 + $0x18] sm:$0xff] %v409
    %418 = vst [vmem:[#allocation2 + $0x20] sm:$0xff] %v410
    %419 = vst [vmem:[#allocation2 + $0x28] sm:$0xff] %v411
    %420 = vst [vmem:[#allocation2 + $0x30] sm:$0xff] %v412
    %421 = vst.msk [vmem:[#allocation2 + $0x38] sm:$0xff] %vm212, %v413
    %v422 = vld [vmem:[#allocation2] sm:$0xff]
    %v423 = vld [vmem:[#allocation2 + $0x8] sm:$0xff]
    %v424 = vld [vmem:[#allocation2 + $0x10] sm:$0xff]
    %v425 = vld [vmem:[#allocation2 + $0x18] sm:$0xff]
    %v426 = vld [vmem:[#allocation2 + $0x20] sm:$0xff]
    %v427 = vld [vmem:[#allocation2 + $0x28] sm:$0xff]
    %v428 = vld [vmem:[#allocation2 + $0x30] sm:$0xff]
    %v429 = vld [vmem:[#allocation2 + $0x38] sm:$0xff]
    %v430 = vld [vmem:[#allocation12] sm:$0xff]
    %v431 = vld [vmem:[#allocation12 + $0x8] sm:$0xff]
    %v432 = vld [vmem:[#allocation12 + $0x10] sm:$0xff]
    %v433 = vld [vmem:[#allocation12 + $0x18] sm:$0xff]
    %v434 = vld [vmem:[#allocation12 + $0x20] sm:$0xff]
    %v435 = vld [vmem:[#allocation12 + $0x28] sm:$0xff]
    %v436 = vld [vmem:[#allocation12 + $0x30] sm:$0xff]
    %v437 = vld [vmem:[#allocation12 + $0x38] sm:$0xff]
    %v438 = vsub.f32 0.0, %v430
    %v439 = vsub.f32 0.0, %v431
    %v440 = vsub.f32 0.0, %v432
    %v441 = vsub.f32 0.0, %v433
    %v442 = vsub.f32 0.0, %v434
    %v443 = vsub.f32 0.0, %v435
    %v444 = vsub.f32 0.0, %v436
    %v445 = vsub.f32 0.0, %v437
    %v446 = vadd.f32 %v422, %v438
    %v447 = vadd.f32 %v423, %v439
    %v448 = vadd.f32 %v424, %v440
    %v449 = vadd.f32 %v425, %v441
    %v450 = vadd.f32 %v426, %v442
    %v451 = vadd.f32 %v427, %v443
    %v452 = vadd.f32 %v428, %v444
    %v453 = vadd.f32 %v429, %v445
    %454 = vst [vmem:[#allocation2] sm:$0xff] %v446
    %455 = vst [vmem:[#allocation2 + $0x8] sm:$0xff] %v447
    %456 = vst [vmem:[#allocation2 + $0x10] sm:$0xff] %v448
    %457 = vst [vmem:[#allocation2 + $0x18] sm:$0xff] %v449
    %458 = vst [vmem:[#allocation2 + $0x20] sm:$0xff] %v450
    %459 = vst [vmem:[#allocation2 + $0x28] sm:$0xff] %v451
    %460 = vst [vmem:[#allocation2 + $0x30] sm:$0xff] %v452
    %461 = vst.msk [vmem:[#allocation2 + $0x38] sm:$0xff] %vm212, %v453
    %v462 = vld [vmem:[#allocation2] sm:$0xff]
    %v463 = vld [vmem:[#allocation2 + $0x8] sm:$0xff]
    %v464 = vld [vmem:[#allocation2 + $0x10] sm:$0xff]
    %v465 = vld [vmem:[#allocation2 + $0x18] sm:$0xff]
    %v466 = vld [vmem:[#allocation2 + $0x20] sm:$0xff]
    %v467 = vld [vmem:[#allocation2 + $0x28] sm:$0xff]
    %v468 = vld [vmem:[#allocation2 + $0x30] sm:$0xff]
    %v469 = vld [vmem:[#allocation2 + $0x38] sm:$0xff]
    %v470 = vld [vmem:[#allocation14] sm:$0xff]
    %v471 = vld [vmem:[#allocation14 + $0x8] sm:$0xff]
    %v472 = vld [vmem:[#allocation14 + $0x10] sm:$0xff]
    %v473 = vld [vmem:[#allocation14 + $0x18] sm:$0xff]
    %v474 = vld [vmem:[#allocation14 + $0x20] sm:$0xff]
    %v475 = vld [vmem:[#allocation14 + $0x28] sm:$0xff]
    %v476 = vld [vmem:[#allocation14 + $0x30] sm:$0xff]
    %v477 = vld [vmem:[#allocation14 + $0x38] sm:$0xff]
    %v478 = vsub.f32 0.0, %v470
    %v479 = vsub.f32 0.0, %v471
    %v480 = vsub.f32 0.0, %v472
    %v481 = vsub.f32 0.0, %v473
    %v482 = vsub.f32 0.0, %v474
    %v483 = vsub.f32 0.0, %v475
    %v484 = vsub.f32 0.0, %v476
    %v485 = vsub.f32 0.0, %v477
    %v486 = vadd.f32 %v462, %v478
    %v487 = vadd.f32 %v463, %v479
    %v488 = vadd.f32 %v464, %v480
    %v489 = vadd.f32 %v465, %v481
    %v490 = vadd.f32 %v466, %v482
    %v491 = vadd.f32 %v467, %v483
    %v492 = vadd.f32 %v468, %v484
    %v493 = vadd.f32 %v469, %v485
    %494 = vst [vmem:[#allocation2] sm:$0xff] %v486
    %495 = vst [vmem:[#allocation2 + $0x8] sm:$0xff] %v487
    %496 = vst [vmem:[#allocation2 + $0x10] sm:$0xff] %v488
    %497 = vst [vmem:[#allocation2 + $0x18] sm:$0xff] %v489
    %498 = vst [vmem:[#allocation2 + $0x20] sm:$0xff] %v490
    %499 = vst [vmem:[#allocation2 + $0x28] sm:$0xff] %v491
    %500 = vst [vmem:[#allocation2 + $0x30] sm:$0xff] %v492
    %501 = vst.msk [vmem:[#allocation2 + $0x38] sm:$0xff] %vm212, %v493
    // Predicated region
    $region62: #{tpu_custom_call.1} parent=1 // pred_check
      %p502 = pneg %p152
    $region63: #{tpu_custom_call.1} parent=1 // pred_check_branch
      %504 = sbr.rel (%p502) target = $region65
    $region64: #{tpu_custom_call.1} parent=1 // pred_region
      %v505 = vld [vmem:[#allocation2] sm:$0xff]
      %v506 = vld [vmem:[#allocation2 + $0x8] sm:$0xff]
      %v507 = vld [vmem:[#allocation2 + $0x10] sm:$0xff]
      %v508 = vld [vmem:[#allocation2 + $0x18] sm:$0xff]
      %v509 = vld [vmem:[#allocation2 + $0x20] sm:$0xff]
      %v510 = vld [vmem:[#allocation2 + $0x28] sm:$0xff]
      %v511 = vld [vmem:[#allocation2 + $0x30] sm:$0xff]
      %v512 = vld [vmem:[#allocation2 + $0x38] sm:$0xff]
      %v513 = vadd.f32 %v505, %v506
      %v514 = vadd.f32 %v513, %v507
      %v515 = vadd.f32 %v514, %v508
      %v516 = vadd.f32 %v515, %v509
      %v517 = vadd.f32 %v516, %v510
      %v518 = vadd.f32 %v517, %v511
      %v519 = vsel %vm212, %v512, 0.0
      %v520 = vadd.f32 %v518, %v519
      %521 = vadd.xlane.f32.xlu0 %v520
      %v522 = vpop.xlane.xlu0 %521
      %v523 = vrot.slane %v522, 4
      %v524 = vadd.f32 %v522, %v523
      %v525 = vrot.slane %v524, 2
      %v526 = vadd.f32 %v524, %v525
      %v527 = vrot.slane %v526, 1
      %v528 = vadd.f32 %v526, %v527
      %s529 = vtos %v528
      %v530 = vstv %s529
      %531 = vst [vmem:[#allocation15] sm:$0xff] %v530
    $region65: #{tpu_custom_call.1} parent=1 // pred_fallthru
      _
    // Predicated region
    $region66: #{tpu_custom_call.1} parent=1 // pred_check
      _
    $region67: #{tpu_custom_call.1} parent=1 // pred_check_branch
      %533 = sbr.rel (0) target = $region69
    $region68: #{tpu_custom_call.1} parent=1 // pred_region
      %s535 = ssub.s32 128, 128
      %536 = vsyncadd [#allocation5], %s535
      %s538 = sshll.u32 [#allocation15], 4
      %s539 = int_to_ptr.vmem [resolvable:$true] %s538
      %541 = dma.vmem_to_hbm [thread:$0]  %s539, 128, %s7, [#allocation5]
    $region69: #{tpu_custom_call.1} parent=1 // pred_fallthru
      _
    // Predicated region
    $region70: #{tpu_custom_call.1} parent=1 // pred_check
      _
    $region71: #{tpu_custom_call.1} parent=1 // pred_check_branch
      %543 = sbr.rel (0) target = $region73
    $region72: #{tpu_custom_call.1} parent=1 // pred_region
      %544 = dma.done [#allocation5], 128
    $region73: #{tpu_custom_call.1} parent=1 // pred_fallthru
      _
    %545 = vsyncpa [#allocation4], 1
    %546 = vsyncpa [#allocation7], 1
    %547 = vsyncpa [#allocation10], 1
    %548 = vsyncpa [#allocation13], 1
    %549 = vsyncpa [#allocation5], 1

</llo_original>
